<compile_context>
chip_gen: v6e
topology: v6e:2x2x1
jax: 0.10.0
libtpu: 0.0.40
codegen_flags: <defaults>
</compile_context>

<pallas_src>
import numpy as np
import jax
import jax.numpy as jnp
from jax import lax
from jax.experimental import pallas as pl
from jax.experimental.pallas import tpu as pltpu

MIN_STD = 0.01
EPS = 1e-6
TN = 128          # output-time tile width (lanes)
KW = 3 * TN       # band-slab width per tile = tile + 2*TN halo (LTA band 200 <= 2*TN)
TARGET_M = 128    # stacked MXU rows per matmul (full v5e pass; good on v6e/v7x)


def _cdiv(a, b):
    return -(-a // b)


def gaussian_window(window_size_param, length, min_std=MIN_STD):
    # == LearnableGaussianWindow.forward
    t = jnp.linspace(-1.0, 1.0, length)
    std = jnp.abs(window_size_param) + min_std
    w = jnp.exp(-0.5 * (t / std) ** 2)
    return w / jnp.sum(w)


def banded_weight(window, left, pad_l, kw, tn):
    # W[ii, tt] = window[ii - tt + left - pad_l] inside the band, else 0, so
    #   out[tile_start + tt] = sum_ii x_pad[:, tile_start + ii] * W[ii, tt]
    # reproduces F.conv1d(x, window, padding='same') (cross-correlation with
    # left pad = (L-1)//2) for every output tile.
    L = window.shape[0]
    ii = jnp.arange(kw)[:, None]
    tt = jnp.arange(tn)[None, :]
    j = ii - tt + (left - pad_l)
    valid = (j >= 0) & (j < L)
    return jnp.where(valid, window[jnp.clip(j, 0, L - 1)], 0.0).astype(jnp.float32)


def quake_detection_forward(x, sta_param, lta_param, fc_weight, fc_bias):
    x = jnp.asarray(x, jnp.float32)
    B, T = x.shape
    sta_len = min(T, 50)
    lta_len = min(T, 200)
    left_sta = (sta_len - 1) // 2
    left_lta = (lta_len - 1) // 2
    pad_l = left_lta                       # common left offset baked into x_pad
    assert lta_len - 1 <= 2 * TN           # band + halo fits in the 3*TN slab

    B_pad = ((B + 7) // 8) * 8             # sublane-aligned batch
    NT = _cdiv(T, TN)                      # number of output-time tiles

    # G output tiles per grid step, stacked along the MXU M axis.
    G = max(1, min(TARGET_M // B_pad if B_pad <= TARGET_M else 1, NT))
    if NT >= 2:
        G = min(G, _cdiv(NT, 2))           # keep >= 2 grid steps (v7x megacore)
    G = max(G, 1)
    NS = _cdiv(NT, G)                      # grid steps
    T_out_pad = NS * G * TN
    n_in_tn = _cdiv(NS * G + 2, G) * G     # input width (in TN units) >= span + halo
    T_in_pad = n_in_tn * TN

    # Zero-padded input: 'same'-conv zero padding is baked in; bf16 MXU operand.
    x_pad = jnp.zeros((B_pad, T_in_pad), jnp.float32)
    x_pad = x_pad.at[:B, pad_l:pad_l + T].set(x)
    x_pad = x_pad.astype(jnp.bfloat16)

    # Fused banded weights: (KW, 2*TN) = [W_sta | W_lta], bf16 MXU operand.
    w_sta = gaussian_window(sta_param, sta_len)
    w_lta = gaussian_window(lta_param, lta_len)
    w_fused = jnp.concatenate(
        [banded_weight(w_sta, left_sta, pad_l, KW, TN),
         banded_weight(w_lta, left_lta, pad_l, KW, TN)],
        axis=1).astype(jnp.bfloat16)

    fc_params = jnp.concatenate(
        [fc_weight.reshape(-1), fc_bias.reshape(-1)]).astype(jnp.float32)  # (4,)

    def kernel(xm_ref, xh1_ref, xh2_ref, w_ref, fc_ref, out_ref, det_ref):
        # Band slab covering this step's G output tiles + 2*TN halo (bf16).
        x_full = jnp.concatenate(
            [xm_ref[...], xh1_ref[...], xh2_ref[...]], axis=-1)   # (B_pad, (G+2)*TN)
        # Stack the G overlapping (B_pad, 3*TN) tile-slabs along M (sublanes) and
        # run ONE fused MXU matmul with f32 accumulation.
        parts = [x_full[:, g * TN:(g + 3) * TN] for g in range(G)]
        slab = parts[0] if G == 1 else jnp.concatenate(parts, axis=0)
        acc = jnp.dot(slab, w_ref[...], preferred_element_type=jnp.float32)
        sta = acc[:, :TN]                  # (G*B_pad, TN) f32
        lta = acc[:, TN:]
        ratio = sta * pl.reciprocal(lta + EPS, approx=True)
        # nn.Linear(3, 1) over (sta, lta, ratio) channels + sigmoid, computed on
        # the full stacked tile (fc scalars broadcast once per step).
        logits = sta * fc_ref[0] + lta * fc_ref[1] + ratio * fc_ref[2] + fc_ref[3]
        sig = jnp.clip(pl.reciprocal(1.0 + jnp.exp(-logits), approx=True), 0.0, 1.0)
        # De-stack: row-group g -> output time columns [g*TN, (g+1)*TN).
        for g in range(G):
            rows = slice(g * B_pad, (g + 1) * B_pad)
            cols = slice(g * TN, (g + 1) * TN)
            out_ref[:, cols] = sig[rows, :]
            det_ref[:, 0, cols] = sta[rows, :]
            det_ref[:, 1, cols] = lta[rows, :]
            det_ref[:, 2, cols] = ratio[rows, :]

    grid_spec = pltpu.PrefetchScalarGridSpec(
        num_scalar_prefetch=0,
        grid=(NS,),
        in_specs=[
            pl.BlockSpec((B_pad, G * TN), lambda s: (0, s)),            # main G tiles
            pl.BlockSpec((B_pad, TN), lambda s: (0, (s + 1) * G)),      # halo tile +1
            pl.BlockSpec((B_pad, TN), lambda s: (0, (s + 1) * G + 1)),  # halo tile +2
            pl.BlockSpec((KW, 2 * TN), lambda s: (0, 0)),               # resident weights
            pl.BlockSpec(memory_space=pltpu.MemorySpace.SMEM),          # fc scalars
        ],
        out_specs=[
            pl.BlockSpec((B_pad, G * TN), lambda s: (0, s)),
            pl.BlockSpec((B_pad, 3, G * TN), lambda s: (0, 0, s)),
        ],
    )
    cost = pl.CostEstimate(
        flops=2 * (G * B_pad) * KW * (2 * TN) * NS + 10 * B_pad * T_out_pad,
        transcendentals=3 * B_pad * T_out_pad,
        bytes_accessed=(B_pad * NS * (G + 2) * TN * 2      # bf16 x reads (halo re-read)
                        + KW * 2 * TN * 2 + 4 * 4          # weights + fc scalars
                        + 4 * B_pad * T_out_pad * 4),      # f32 out + det(3) writes
    )
    # TODO(synk): if B_pad * G * TN blocks ever exceed ~20 MiB (very large batch),
    # add a leading "parallel" batch grid axis and re-derive the v7x 64 MiB budget.
    out_pad, det_pad = pl.pallas_call(
        kernel,
        out_shape=(jax.ShapeDtypeStruct((B_pad, T_out_pad), jnp.float32),
                   jax.ShapeDtypeStruct((B_pad, 3, T_out_pad), jnp.float32)),
        grid_spec=grid_spec,
        compiler_params=pltpu.CompilerParams(
            dimension_semantics=("parallel",),
            vmem_limit_bytes=32 * 1024 * 1024),
        cost_estimate=cost,
    )(x_pad, x_pad, x_pad, w_fused, fc_params)

    output = out_pad[:B, :T]                 # sigmoid(fc(...)).squeeze() -> (B, T)
    detections = det_pad[:B, :, :T]          # (B, 3, T): channels (sta, lta, ratio)
    return output, detections


if __name__ == "__main__":
    # T=512 exercises both window cutoffs (min(T,50)=50, min(T,200)=200), a
    # multi-step grid (NS=2, G=2 tiles stacked per step); B=4 pads to 8 sublanes.
    B, T = 4, 512
    key = jax.random.PRNGKey(0)
    kx, kw = jax.random.split(key)
    x = jax.random.normal(kx, (B, T), dtype=jnp.float32)

    # Deterministic parameters: QuakeDetectionNet(initial_sta_length=5.0,
    # initial_lta_length=20.0); fc = nn.Linear(3, 1).
    sta_param = jnp.float32(5.0)
    lta_param = jnp.float32(20.0)
    fc_weight = jax.random.normal(kw, (1, 3), dtype=jnp.float32) * 0.5
    fc_bias = jnp.zeros((1,), dtype=jnp.float32)

    out, detections = jax.block_until_ready(
        quake_detection_forward(x, sta_param, lta_param, fc_weight, fc_bias))

    assert out.shape == (B, T) and detections.shape == (B, 3, T)

    # Independent plain-JAX f32 reference for the conv hot path
    # (cross-correlation with PyTorch 'same' padding: left = (L-1)//2).
    def ref_conv_same(xx, w):
        L = w.shape[0]
        left = (L - 1) // 2
        right = L - 1 - left
        return lax.conv_general_dilated(
            xx[:, None, :], w[None, None, :], window_strides=(1,),
            padding=[(left, right)],
            dimension_numbers=("NCH", "OIH", "NCH"))[:, 0, :]

    sta_ref = ref_conv_same(x, gaussian_window(sta_param, min(T, 50)))
    lta_ref = ref_conv_same(x, gaussian_window(lta_param, min(T, 200)))
    np.testing.assert_allclose(np.asarray(detections[:, 0]), np.asarray(sta_ref),
                               rtol=2e-2, atol=2e-2)
    np.testing.assert_allclose(np.asarray(detections[:, 1]), np.asarray(lta_ref),
                               rtol=2e-2, atol=2e-2)
    o = np.asarray(out)
    assert np.all(np.isfinite(o)) and np.all((o >= 0.0) & (o <= 1.0))
    print("KERNEL_OK")
</pallas_src>

<mosaic_0001>
module attributes {stable_mosaic.version = 11 : i64} {
  func.func @kernel(%arg0: i32, %arg1: memref<8x256xbf16, #tpu.memory_space<vmem>>, %arg2: memref<8x128xbf16, #tpu.memory_space<vmem>>, %arg3: memref<8x128xbf16, #tpu.memory_space<vmem>>, %arg4: memref<384x256xbf16, #tpu.memory_space<vmem>>, %arg5: memref<4xf32, #tpu.memory_space<smem>>, %arg6: memref<8x256xf32, #tpu.memory_space<vmem>>, %arg7: memref<8x3x256xf32, #tpu.memory_space<vmem>>) attributes {dimension_semantics = [#tpu.dimension_semantics<parallel>], iteration_bounds = array<i64: 2>, scalar_prefetch = 0 : i64, scratch_operands = 0 : i64, tpu.core_type = #tpu.core_type<tc>, window_params = [{transform_indices = @transform_0, window_bounds = array<i64: 8, 256>}, {transform_indices = @transform_1, window_bounds = array<i64: 8, 128>}, {transform_indices = @transform_2, window_bounds = array<i64: 8, 128>}, {pipeline_mode = #tpu.pipeline_mode<synchronous>, transform_indices = @transform_3, window_bounds = array<i64: 384, 256>}, {transform_indices = @transform_4, window_bounds = array<i64: 4>}, {transform_indices = @transform_5, window_bounds = array<i64: 8, 256>}, {transform_indices = @transform_6, window_bounds = array<i64: 8, 3, 256>}]} {
    %c0 = arith.constant 0 : index
    %c0_0 = arith.constant 0 : index
    %0 = vector.load %arg1[%c0, %c0_0] : memref<8x256xbf16, #tpu.memory_space<vmem>>, vector<8x256xbf16>
    %c0_1 = arith.constant 0 : index
    %c0_2 = arith.constant 0 : index
    %1 = vector.load %arg2[%c0_1, %c0_2] : memref<8x128xbf16, #tpu.memory_space<vmem>>, vector<8x128xbf16>
    %c0_3 = arith.constant 0 : index
    %c0_4 = arith.constant 0 : index
    %2 = vector.load %arg3[%c0_3, %c0_4] : memref<8x128xbf16, #tpu.memory_space<vmem>>, vector<8x128xbf16>
    %3 = tpu.concatenate %0, %1, %2 in 1 : vector<8x256xbf16>, vector<8x128xbf16>, vector<8x128xbf16> -> vector<8x512xbf16>
    %4 = vector.extract_strided_slice %3 {offsets = [0, 0], sizes = [8, 384], strides = [1, 1]} : vector<8x512xbf16> to vector<8x384xbf16>
    %5 = vector.extract_strided_slice %3 {offsets = [0, 128], sizes = [8, 384], strides = [1, 1]} : vector<8x512xbf16> to vector<8x384xbf16>
    %6 = tpu.concatenate %4, %5 in 0 : vector<8x384xbf16>, vector<8x384xbf16> -> vector<16x384xbf16>
    %c0_5 = arith.constant 0 : index
    %c0_6 = arith.constant 0 : index
    %7 = vector.load %arg4[%c0_5, %c0_6] : memref<384x256xbf16, #tpu.memory_space<vmem>>, vector<384x256xbf16>
    %cst = arith.constant dense<0.000000e+00> : vector<16x256xf32>
    %8 = tpu.matmul %6, %7, %cst {dimension_numbers = #tpu.dot_dimension_numbers<[1], [0], [0], [1], [0, 0, 1, 1], [], []>} : vector<16x384xbf16>, vector<384x256xbf16>, vector<16x256xf32> -> vector<16x256xf32>
    %9 = vector.extract_strided_slice %8 {offsets = [0, 0], sizes = [16, 128], strides = [1, 1]} : vector<16x256xf32> to vector<16x128xf32>
    %10 = vector.extract_strided_slice %8 {offsets = [0, 128], sizes = [16, 128], strides = [1, 1]} : vector<16x256xf32> to vector<16x128xf32>
    %cst_7 = arith.constant 9.99999997E-7 : f32
    %11 = vector.broadcast %cst_7 : f32 to vector<16x128xf32>
    %12 = arith.addf %10, %11 : vector<16x128xf32>
    %13 = tpu.reciprocal %12 {approx = true} : vector<16x128xf32> -> vector<16x128xf32>
    %14 = arith.mulf %9, %13 : vector<16x128xf32>
    %c0_8 = arith.constant 0 : index
    %15 = memref.load %arg5[%c0_8] : memref<4xf32, #tpu.memory_space<smem>>
    %16 = vector.broadcast %15 : f32 to vector<16x128xf32>
    %17 = arith.mulf %9, %16 : vector<16x128xf32>
    %c1 = arith.constant 1 : index
    %18 = memref.load %arg5[%c1] : memref<4xf32, #tpu.memory_space<smem>>
    %19 = vector.broadcast %18 : f32 to vector<16x128xf32>
    %20 = arith.mulf %10, %19 : vector<16x128xf32>
    %21 = arith.addf %17, %20 : vector<16x128xf32>
    %c2 = arith.constant 2 : index
    %22 = memref.load %arg5[%c2] : memref<4xf32, #tpu.memory_space<smem>>
    %23 = vector.broadcast %22 : f32 to vector<16x128xf32>
    %24 = arith.mulf %14, %23 : vector<16x128xf32>
    %25 = arith.addf %21, %24 : vector<16x128xf32>
    %c3 = arith.constant 3 : index
    %26 = memref.load %arg5[%c3] : memref<4xf32, #tpu.memory_space<smem>>
    %27 = vector.broadcast %26 : f32 to vector<16x128xf32>
    %28 = arith.addf %25, %27 : vector<16x128xf32>
    %cst_9 = arith.constant 0.000000e+00 : f32
    %29 = vector.broadcast %cst_9 : f32 to vector<16x128xf32>
    %30 = arith.subf %29, %28 : vector<16x128xf32>
    %31 = math.exp %30 : vector<16x128xf32>
    %cst_10 = arith.constant 1.000000e+00 : f32
    %32 = vector.broadcast %cst_10 : f32 to vector<16x128xf32>
    %33 = arith.addf %32, %31 : vector<16x128xf32>
    %34 = tpu.reciprocal %33 {approx = true} : vector<16x128xf32> -> vector<16x128xf32>
    %cst_11 = arith.constant 0.000000e+00 : f32
    %cst_12 = arith.constant 1.000000e+00 : f32
    %35 = vector.broadcast %cst_11 : f32 to vector<16x128xf32>
    %36 = arith.maximumf %35, %34 : vector<16x128xf32>
    %37 = vector.broadcast %cst_12 : f32 to vector<16x128xf32>
    %38 = arith.minimumf %37, %36 : vector<16x128xf32>
    %39 = vector.extract_strided_slice %38 {offsets = [0, 0], sizes = [8, 128], strides = [1, 1]} : vector<16x128xf32> to vector<8x128xf32>
    %c0_13 = arith.constant 0 : index
    %c0_14 = arith.constant 0 : index
    %40 = vector.load %arg6[%c0_13, %c0_14] : memref<8x256xf32, #tpu.memory_space<vmem>>, vector<8x128xf32>
    tpu.vector_store %arg6[%c0_13, %c0_14], %39 {strides = array<i32>} : memref<8x256xf32, #tpu.memory_space<vmem>>, vector<8x128xf32>,
    %41 = vector.extract_strided_slice %9 {offsets = [0, 0], sizes = [8, 128], strides = [1, 1]} : vector<16x128xf32> to vector<8x128xf32>
    %c0_15 = arith.constant 0 : index
    %c0_16 = arith.constant 0 : index
    %c0_17 = arith.constant 0 : index
    %42 = vector.load %arg7[%c0_15, %c0_16, %c0_17] : memref<8x3x256xf32, #tpu.memory_space<vmem>>, vector<8x1x128xf32>
    %43 = vector.shape_cast %42 : vector<8x1x128xf32> to vector<8x128xf32>
    %44 = vector.shape_cast %41 : vector<8x128xf32> to vector<8x1x128xf32>
    tpu.vector_store %arg7[%c0_15, %c0_16, %c0_17], %44 {strides = array<i32>} : memref<8x3x256xf32, #tpu.memory_space<vmem>>, vector<8x1x128xf32>,
    %45 = vector.extract_strided_slice %10 {offsets = [0, 0], sizes = [8, 128], strides = [1, 1]} : vector<16x128xf32> to vector<8x128xf32>
    %c0_18 = arith.constant 0 : index
    %c1_19 = arith.constant 1 : index
    %c0_20 = arith.constant 0 : index
    %46 = vector.load %arg7[%c0_18, %c1_19, %c0_20] : memref<8x3x256xf32, #tpu.memory_space<vmem>>, vector<8x1x128xf32>
    %47 = vector.shape_cast %46 : vector<8x1x128xf32> to vector<8x128xf32>
    %48 = vector.shape_cast %45 : vector<8x128xf32> to vector<8x1x128xf32>
    tpu.vector_store %arg7[%c0_18, %c1_19, %c0_20], %48 {strides = array<i32>} : memref<8x3x256xf32, #tpu.memory_space<vmem>>, vector<8x1x128xf32>,
    %49 = vector.extract_strided_slice %14 {offsets = [0, 0], sizes = [8, 128], strides = [1, 1]} : vector<16x128xf32> to vector<8x128xf32>
    %c0_21 = arith.constant 0 : index
    %c2_22 = arith.constant 2 : index
    %c0_23 = arith.constant 0 : index
    %50 = vector.load %arg7[%c0_21, %c2_22, %c0_23] : memref<8x3x256xf32, #tpu.memory_space<vmem>>, vector<8x1x128xf32>
    %51 = vector.shape_cast %50 : vector<8x1x128xf32> to vector<8x128xf32>
    %52 = vector.shape_cast %49 : vector<8x128xf32> to vector<8x1x128xf32>
    tpu.vector_store %arg7[%c0_21, %c2_22, %c0_23], %52 {strides = array<i32>} : memref<8x3x256xf32, #tpu.memory_space<vmem>>, vector<8x1x128xf32>,
    %53 = vector.extract_strided_slice %38 {offsets = [8, 0], sizes = [8, 128], strides = [1, 1]} : vector<16x128xf32> to vector<8x128xf32>
    %c0_24 = arith.constant 0 : index
    %c128 = arith.constant 128 : index
    %54 = vector.load %arg6[%c0_24, %c128] : memref<8x256xf32, #tpu.memory_space<vmem>>, vector<8x128xf32>
    tpu.vector_store %arg6[%c0_24, %c128], %53 {strides = array<i32>} : memref<8x256xf32, #tpu.memory_space<vmem>>, vector<8x128xf32>,
    %55 = vector.extract_strided_slice %9 {offsets = [8, 0], sizes = [8, 128], strides = [1, 1]} : vector<16x128xf32> to vector<8x128xf32>
    %c0_25 = arith.constant 0 : index
    %c0_26 = arith.constant 0 : index
    %c128_27 = arith.constant 128 : index
    %56 = vector.load %arg7[%c0_25, %c0_26, %c128_27] : memref<8x3x256xf32, #tpu.memory_space<vmem>>, vector<8x1x128xf32>
    %57 = vector.shape_cast %56 : vector<8x1x128xf32> to vector<8x128xf32>
    %58 = vector.shape_cast %55 : vector<8x128xf32> to vector<8x1x128xf32>
    tpu.vector_store %arg7[%c0_25, %c0_26, %c128_27], %58 {strides = array<i32>} : memref<8x3x256xf32, #tpu.memory_space<vmem>>, vector<8x1x128xf32>,
    %59 = vector.extract_strided_slice %10 {offsets = [8, 0], sizes = [8, 128], strides = [1, 1]} : vector<16x128xf32> to vector<8x128xf32>
    %c0_28 = arith.constant 0 : index
    %c1_29 = arith.constant 1 : index
    %c128_30 = arith.constant 128 : index
    %60 = vector.load %arg7[%c0_28, %c1_29, %c128_30] : memref<8x3x256xf32, #tpu.memory_space<vmem>>, vector<8x1x128xf32>
    %61 = vector.shape_cast %60 : vector<8x1x128xf32> to vector<8x128xf32>
    %62 = vector.shape_cast %59 : vector<8x128xf32> to vector<8x1x128xf32>
    tpu.vector_store %arg7[%c0_28, %c1_29, %c128_30], %62 {strides = array<i32>} : memref<8x3x256xf32, #tpu.memory_space<vmem>>, vector<8x1x128xf32>,
    %63 = vector.extract_strided_slice %14 {offsets = [8, 0], sizes = [8, 128], strides = [1, 1]} : vector<16x128xf32> to vector<8x128xf32>
    %c0_31 = arith.constant 0 : index
    %c2_32 = arith.constant 2 : index
    %c128_33 = arith.constant 128 : index
    %64 = vector.load %arg7[%c0_31, %c2_32, %c128_33] : memref<8x3x256xf32, #tpu.memory_space<vmem>>, vector<8x1x128xf32>
    %65 = vector.shape_cast %64 : vector<8x1x128xf32> to vector<8x128xf32>
    %66 = vector.shape_cast %63 : vector<8x128xf32> to vector<8x1x128xf32>
    tpu.vector_store %arg7[%c0_31, %c2_32, %c128_33], %66 {strides = array<i32>} : memref<8x3x256xf32, #tpu.memory_space<vmem>>, vector<8x1x128xf32>,
    return
  }
  func.func @transform_0(%arg0: i32) -> (i32, i32) {
    %c0_i32 = arith.constant 0 : i32
    %c0_i32_0 = arith.constant 0 : i32
    return %c0_i32, %arg0 : i32, i32
  }
  func.func @transform_1(%arg0: i32) -> (i32, i32) {
    %c1_i32 = arith.constant 1 : i32
    %0 = arith.addi %arg0, %c1_i32 : i32
    %c2_i32 = arith.constant 2 : i32
    %1 = arith.muli %0, %c2_i32 : i32
    %c0_i32 = arith.constant 0 : i32
    %c0_i32_0 = arith.constant 0 : i32
    return %c0_i32, %1 : i32, i32
  }
  func.func @transform_2(%arg0: i32) -> (i32, i32) {
    %c1_i32 = arith.constant 1 : i32
    %0 = arith.addi %arg0, %c1_i32 : i32
    %c2_i32 = arith.constant 2 : i32
    %1 = arith.muli %0, %c2_i32 : i32
    %c1_i32_0 = arith.constant 1 : i32
    %2 = arith.addi %1, %c1_i32_0 : i32
    %c0_i32 = arith.constant 0 : i32
    %c0_i32_1 = arith.constant 0 : i32
    return %c0_i32, %2 : i32, i32
  }
  func.func @transform_3(%arg0: i32) -> (i32, i32) {
    %c0_i32 = arith.constant 0 : i32
    %c0_i32_0 = arith.constant 0 : i32
    %c0_i32_1 = arith.constant 0 : i32
    return %c0_i32, %c0_i32_0 : i32, i32
  }
  func.func @transform_4(%arg0: i32) -> i32 {
    %c0_i32 = arith.constant 0 : i32
    %c0_i32_0 = arith.constant 0 : i32
    return %c0_i32 : i32
  }
  func.func @transform_5(%arg0: i32) -> (i32, i32) {
    %c0_i32 = arith.constant 0 : i32
    %c0_i32_0 = arith.constant 0 : i32
    return %c0_i32, %arg0 : i32, i32
  }
  func.func @transform_6(%arg0: i32) -> (i32, i32, i32) {
    %c0_i32 = arith.constant 0 : i32
    %c0_i32_0 = arith.constant 0 : i32
    %c0_i32_1 = arith.constant 0 : i32
    return %c0_i32, %c0_i32_0, %arg0 : i32, i32, i32
  }
}

</mosaic_0001>

<llo_original>
// kernel: tpu_custom_call.1
$region0: #{tpu_custom_call.1}
  #allocation0 [shape = 'u32[]', space=smem, size = 0x4, offset = 0x4, fixed_abs, tag = 'smem constant byte address 0x4 - core index']
  #allocation1 [shape = 'u32[144,128]{1,0:T(1,128)}', space=vmem, size = 0x12000, scoped, tag = 'internal scratch']
  %s0 = inlined_call_operand.hbm [shape: bf16[8,768], index: 0, kind: input, shape index: {}]
  %s1 = inlined_call_operand.hbm [shape: bf16[8,768], index: 1, kind: input, shape index: {}]
  %s2 = inlined_call_operand.hbm [shape: bf16[8,768], index: 2, kind: input, shape index: {}]
  %s3 = inlined_call_operand.hbm [shape: bf16[384,256], index: 3, kind: input, shape index: {}]
  %s4 = inlined_call_operand.vmem [shape: f32[4], index: 4, kind: input, shape index: {}]
  %s5 = inlined_call_operand.hbm [shape: f32[8,512], index: 5, kind: output, shape index: {0}]
  %s6 = inlined_call_operand.vmem [shape: f32[8,3,512], index: 6, kind: output, shape index: {1}]
  %7 = xla_tuple %s5, %s6
  %s8 = sld [smem:[#allocation0]]
  $region115: #{tpu_custom_call.1} parent=0
    _
  %s10 = ssub.s32 1, %s8
  %s11 = scalar_select 0, %s10, %s8
  $region1: #{tpu_custom_call.1} parent=0
    #allocation2 [shape = 'u8[8192]{0}', space=vmem, size = 0x2000, scoped, tag = 'input window, operand 0']
    #allocation3 [shape = 's32[2]{0}', space=sflag, size = 0x8, scoped, tag = 'scoped memory for tpu_custom_call.1']
    #allocation4 [shape = 's32[2]{0}', space=sflag, size = 0x8, scoped, tag = 'scoped memory for tpu_custom_call.1']
    #allocation5 [shape = 's32[2]{0}', space=sflag, size = 0x8, scoped, tag = 'scoped memory for tpu_custom_call.1']
    #allocation6 [shape = 'u8[4096]{0}', space=vmem, size = 0x1000, scoped, tag = 'input window, operand 1']
    #allocation7 [shape = 's32[2]{0}', space=sflag, size = 0x8, scoped, tag = 'scoped memory for tpu_custom_call.1']
    #allocation8 [shape = 'u8[4096]{0}', space=vmem, size = 0x1000, scoped, tag = 'input window, operand 2']
    #allocation9 [shape = 'u8[196608]{0}', space=vmem, size = 0x30000, scoped, tag = 'input window, operand 3, single buffered']
    #allocation10 [shape = 's32[1]{0}', space=sflag, size = 0x4, scoped, tag = 'scoped memory for tpu_custom_call.1']
    #allocation11 [shape = 'u8[512]{0}', space=smem, size = 0x200, scoped, tag = 'input window, operand 4, single buffered']
    #allocation12 [shape = 'u8[16384]{0}', space=vmem, size = 0x4000, scoped, tag = 'output window, operand 0']
    #allocation13 [shape = 'u8[65536]{0}', space=vmem, size = 0x10000, scoped, tag = 'output window, operand 1']
    %12 = vsyncpa [#allocation3], 0
    %s13 = scalar_lea.sflag [#allocation3], 1
    %14 = vsyncpa %s13, 0
    %15 = vsyncpa [#allocation7], 0
    %s16 = scalar_lea.sflag [#allocation7], 1
    %17 = vsyncpa %s16, 0
    %18 = vsyncpa [#allocation10], 0
    %19 = vsyncpa [#allocation5], 0
    %20 = vsyncpa [#allocation4], 0
    %s21 = scalar_lea.sflag [#allocation4], 1
    %22 = vsyncpa %s21, 0
    loop: start=0, step=1, limit=4
    $region2: #{tpu_custom_call.1} parent=1 // loop_pre_header
      _
    $region3: #{tpu_custom_call.1} parent=1 // loop_header
      %s24 = sphi 0, %s28
      %p25 = scmp.ge.s32.totalorder %s24, 4
      %s34 = sphi 0, %s36
      %s37 = sphi 0, %s34
      %s38 = sphi 0, %s37
      %s54 = sphi 0, %s38
      %s64 = sphi 0, %s66
      %s67 = sphi 0, %s64
      %s68 = sphi 0, %s67
      %s84 = sphi 0, %s68
      %s96 = sphi 0, %s98
      %s99 = sphi 0, %s96
      %s100 = sphi 0, %s99
      %s116 = sphi 0, %s100
      %s120 = sphi 0, %s120
      %s122 = sphi 0, %s120
      %s123 = sphi 0, %s122
      %s137 = sphi 0, %s123
      %s141 = sphi 0, %s141
      %s143 = sphi 0, %s141
      %s144 = sphi 0, %s143
      %s158 = sphi 0, %s144
      %s164 = sphi 0, %s166
      %s167 = sphi 0, %s164
      %s168 = sphi 0, %s167
      %s184 = sphi 0, %s168
      %s190 = sphi 0, %s192
      %s193 = sphi 0, %s190
      %s194 = sphi 0, %s193
      %s210 = sphi 0, %s194
    $region4: #{tpu_custom_call.1} parent=1 // loop_header_branch
      %27 = sbr.rel (%p25) target = $region8
    $region5: #{tpu_custom_call.1} parent=1 // loop_body
      %s29 = ssub.s32 %s24, 1
      %s30 = ssub.s32 %s24, 2
      %s31 = sadd.s32 %s24, 1
      %s32 = ssub.s32 %s24, %s31
      %p33 = scmp.eq.s32.totalorder %s32, 0
      %s35 = sadd.s32 %s34, 1
      %s36 = scalar_select %p33, %s34, %s35
      %p39 = pneg %p33
      %p40 = scmp.eq.s32.totalorder %s24, 1
      %p41 = por %p39, %p40
      %p42 = scmp.ne.s32.totalorder %s34, %s37
      %p43 = scmp.eq.s32.totalorder %s24, 0
      %p44 = por %p42, %p43
      %p45 = scmp.ne.s32.totalorder %s34, %s37
      %p46 = scmp.eq.s32.totalorder %s29, 1
      %p47 = por %p45, %p46
      %p48 = scmp.ne.s32.totalorder %s37, %s38
      %p49 = scmp.eq.s32.totalorder %s29, 0
      %p50 = por %p48, %p49
      %p51 = scmp.ne.s32.totalorder %s37, %s38
      %p52 = scmp.eq.s32.totalorder %s30, 1
      %p53 = por %p51, %p52
      %p55 = scmp.ne.s32.totalorder %s38, %s54
      %p56 = scmp.eq.s32.totalorder %s30, 0
      %p57 = por %p55, %p56
      %s58 = sadd.s32 %s24, 1
      %s59 = smul.u32 %s58, 2
      %s60 = sadd.s32 %s31, 1
      %s61 = smul.u32 %s60, 2
      %s62 = ssub.s32 %s59, %s61
      %p63 = scmp.eq.s32.totalorder %s62, 0
      %s65 = sadd.s32 %s64, 1
      %s66 = scalar_select %p63, %s64, %s65
      %p69 = pneg %p63
      %p70 = scmp.eq.s32.totalorder %s24, 1
      %p71 = por %p69, %p70
      %p72 = scmp.ne.s32.totalorder %s64, %s67
      %p73 = scmp.eq.s32.totalorder %s24, 0
      %p74 = por %p72, %p73
      %p75 = scmp.ne.s32.totalorder %s64, %s67
      %p76 = scmp.eq.s32.totalorder %s29, 1
      %p77 = por %p75, %p76
      %p78 = scmp.ne.s32.totalorder %s67, %s68
      %p79 = scmp.eq.s32.totalorder %s29, 0
      %p80 = por %p78, %p79
      %p81 = scmp.ne.s32.totalorder %s67, %s68
      %p82 = scmp.eq.s32.totalorder %s30, 1
      %p83 = por %p81, %p82
      %p85 = scmp.ne.s32.totalorder %s68, %s84
      %p86 = scmp.eq.s32.totalorder %s30, 0
      %p87 = por %p85, %p86
      %s88 = sadd.s32 %s24, 1
      %s89 = smul.u32 %s88, 2
      %s90 = sadd.s32 %s89, 1
      %s91 = sadd.s32 %s31, 1
      %s92 = smul.u32 %s91, 2
      %s93 = sadd.s32 %s92, 1
      %s94 = ssub.s32 %s90, %s93
      %p95 = scmp.eq.s32.totalorder %s94, 0
      %s97 = sadd.s32 %s96, 1
      %s98 = scalar_select %p95, %s96, %s97
      %p101 = pneg %p95
      %p102 = scmp.eq.s32.totalorder %s24, 1
      %p103 = por %p101, %p102
      %p104 = scmp.ne.s32.totalorder %s96, %s99
      %p105 = scmp.eq.s32.totalorder %s24, 0
      %p106 = por %p104, %p105
      %p107 = scmp.ne.s32.totalorder %s96, %s99
      %p108 = scmp.eq.s32.totalorder %s29, 1
      %p109 = por %p107, %p108
      %p110 = scmp.ne.s32.totalorder %s99, %s100
      %p111 = scmp.eq.s32.totalorder %s29, 0
      %p112 = por %p110, %p111
      %p113 = scmp.ne.s32.totalorder %s99, %s100
      %p114 = scmp.eq.s32.totalorder %s30, 1
      %p115 = por %p113, %p114
      %p117 = scmp.ne.s32.totalorder %s100, %s116
      %p118 = scmp.eq.s32.totalorder %s30, 0
      %p119 = por %p117, %p118
      %s121 = sadd.s32 %s120, 1
      %p124 = scmp.eq.s32.totalorder %s24, 1
      %p125 = scmp.ne.s32.totalorder %s120, %s122
      %p126 = scmp.eq.s32.totalorder %s24, 0
      %p127 = por %p125, %p126
      %p128 = scmp.ne.s32.totalorder %s120, %s122
      %p129 = scmp.eq.s32.totalorder %s29, 1
      %p130 = por %p128, %p129
      %p131 = scmp.ne.s32.totalorder %s122, %s123
      %p132 = scmp.eq.s32.totalorder %s29, 0
      %p133 = por %p131, %p132
      %p134 = scmp.ne.s32.totalorder %s122, %s123
      %p135 = scmp.eq.s32.totalorder %s30, 1
      %p136 = por %p134, %p135
      %p138 = scmp.ne.s32.totalorder %s123, %s137
      %p139 = scmp.eq.s32.totalorder %s30, 0
      %p140 = por %p138, %p139
      %s142 = sadd.s32 %s141, 1
      %p145 = scmp.eq.s32.totalorder %s24, 1
      %p146 = scmp.ne.s32.totalorder %s141, %s143
      %p147 = scmp.eq.s32.totalorder %s24, 0
      %p148 = por %p146, %p147
      %p149 = scmp.ne.s32.totalorder %s141, %s143
      %p150 = scmp.eq.s32.totalorder %s29, 1
      %p151 = por %p149, %p150
      %p152 = scmp.ne.s32.totalorder %s143, %s144
      %p153 = scmp.eq.s32.totalorder %s29, 0
      %p154 = por %p152, %p153
      %p155 = scmp.ne.s32.totalorder %s143, %s144
      %p156 = scmp.eq.s32.totalorder %s30, 1
      %p157 = por %p155, %p156
      %p159 = scmp.ne.s32.totalorder %s144, %s158
      %p160 = scmp.eq.s32.totalorder %s30, 0
      %p161 = por %p159, %p160
      %s162 = ssub.s32 %s24, %s31
      %p163 = scmp.eq.s32.totalorder %s162, 0
      %s165 = sadd.s32 %s164, 1
      %s166 = scalar_select %p163, %s164, %s165
      %p169 = pneg %p163
      %p170 = scmp.eq.s32.totalorder %s24, 1
      %p171 = por %p169, %p170
      %p172 = scmp.ne.s32.totalorder %s164, %s167
      %p173 = scmp.eq.s32.totalorder %s24, 0
      %p174 = por %p172, %p173
      %p175 = scmp.ne.s32.totalorder %s164, %s167
      %p176 = scmp.eq.s32.totalorder %s29, 1
      %p177 = por %p175, %p176
      %p178 = scmp.ne.s32.totalorder %s167, %s168
      %p179 = scmp.eq.s32.totalorder %s29, 0
      %p180 = por %p178, %p179
      %p181 = scmp.ne.s32.totalorder %s167, %s168
      %p182 = scmp.eq.s32.totalorder %s30, 1
      %p183 = por %p181, %p182
      %p185 = scmp.ne.s32.totalorder %s168, %s184
      %p186 = scmp.eq.s32.totalorder %s30, 0
      %p187 = por %p185, %p186
      %s188 = ssub.s32 %s24, %s31
      %p189 = scmp.eq.s32.totalorder %s188, 0
      %s191 = sadd.s32 %s190, 1
      %s192 = scalar_select %p189, %s190, %s191
      %p195 = pneg %p189
      %p196 = scmp.eq.s32.totalorder %s24, 1
      %p197 = por %p195, %p196
      %p198 = scmp.ne.s32.totalorder %s190, %s193
      %p199 = scmp.eq.s32.totalorder %s24, 0
      %p200 = por %p198, %p199
      %p201 = scmp.ne.s32.totalorder %s190, %s193
      %p202 = scmp.eq.s32.totalorder %s29, 1
      %p203 = por %p201, %p202
      %p204 = scmp.ne.s32.totalorder %s193, %s194
      %p205 = scmp.eq.s32.totalorder %s29, 0
      %p206 = por %p204, %p205
      %p207 = scmp.ne.s32.totalorder %s193, %s194
      %p208 = scmp.eq.s32.totalorder %s30, 1
      %p209 = por %p207, %p208
      %p211 = scmp.ne.s32.totalorder %s194, %s210
      %p212 = scmp.eq.s32.totalorder %s30, 0
      %p213 = por %p211, %p212
      %p214 = scmp.le.s32.totalorder 1, %s24
      %p215 = scmp.lt.s32.totalorder %s24, 3
      %p216 = pnand %p214, %p215
      %p217 = pneg %p216
      // Predicated region
      $region9: #{tpu_custom_call.1} parent=5 // pred_check
        _
      $region10: #{tpu_custom_call.1} parent=5 // pred_check_branch
        %219 = sbr.rel (%p216) target = $region12
      $region11: #{tpu_custom_call.1} parent=5 // pred_region
        %s220 = ssub.s32 %s24, 1
        // Predicated region
        $region13: #{tpu_custom_call.1} parent=11 // pred_check
          %p221 = pneg %p133
        $region14: #{tpu_custom_call.1} parent=11 // pred_check_branch
          %223 = sbr.rel (%p221) target = $region16
        $region15: #{tpu_custom_call.1} parent=11 // pred_region
          %s225 = ssub.s32 6144, 6144
          %226 = vsyncadd [#allocation10], %s225
          %s227 = sshll.u32 [#allocation9], 4
          %s228 = int_to_ptr.vmem [resolvable:$true] %s227
          %233 = dma.hbm_to_vmem [thread:$0]  %s3, 6144, %s228, [#allocation10], 128, 128, 8
        $region16: #{tpu_custom_call.1} parent=11 // pred_fallthru
          _
        // Predicated region
        $region17: #{tpu_custom_call.1} parent=11 // pred_check
          %p234 = pneg %p154
        $region18: #{tpu_custom_call.1} parent=11 // pred_check_branch
          %236 = sbr.rel (%p234) target = $region20
        $region19: #{tpu_custom_call.1} parent=11 // pred_region
          %s238 = ssub.s32 16, 16
          %239 = vsyncadd [#allocation5], %s238
          %s241 = sshll.u32 %s4, 4
          %s242 = int_to_ptr.vmem [resolvable:$true] %s241
          %244 = dma.vmem_to_smem %s242, 16, [#allocation11], [#allocation5]
        $region20: #{tpu_custom_call.1} parent=11 // pred_fallthru
          _
      $region12: #{tpu_custom_call.1} parent=5 // pred_fallthru
        _
      %p245 = scmp.lt.s32.totalorder %s24, 2
      // Predicated region
      $region21: #{tpu_custom_call.1} parent=5 // pred_check
        %p246 = pneg %p245
      $region22: #{tpu_custom_call.1} parent=5 // pred_check_branch
        %248 = sbr.rel (%p246) target = $region24
      $region23: #{tpu_custom_call.1} parent=5 // pred_region
        // Predicated region
        $region25: #{tpu_custom_call.1} parent=23 // pred_check
          %p249 = pneg %p44
        $region26: #{tpu_custom_call.1} parent=23 // pred_check_branch
          %251 = sbr.rel (%p249) target = $region28
        $region27: #{tpu_custom_call.1} parent=23 // pred_region
          %s252 = sand.u32 %s34, 1
          %s253 = scalar_lea.sflag [#allocation3], %s252
          %s254 = sand.u32 %s34, 1
          %s255 = smul.addr %s254, 8
          %s256 = scalar_lea.vmem [#allocation2], %s255
          %s257 = smul.u32 2, %s24
          %s259 = ssub.s32 128, 128
          %260 = vsyncadd %s253, %s259
          %s261 = smul.addr %s257, 64
          %s262 = scalar_lea.hbm %s0, %s261
          %s264 = sshll.u32 %s256, 4
          %s265 = int_to_ptr.vmem [resolvable:$true] %s264
          %267 = dma.hbm_to_vmem [thread:$0]  %s262, 128, %s265, %s253
        $region28: #{tpu_custom_call.1} parent=23 // pred_fallthru
          _
        // Predicated region
        $region29: #{tpu_custom_call.1} parent=23 // pred_check
          %p268 = pneg %p74
        $region30: #{tpu_custom_call.1} parent=23 // pred_check_branch
          %270 = sbr.rel (%p268) target = $region32
        $region31: #{tpu_custom_call.1} parent=23 // pred_region
          %s271 = sand.u32 %s24, 1
          %s272 = scalar_lea.sflag [#allocation7], %s271
          %s273 = sand.u32 %s64, 1
          %s274 = smul.addr %s273, 4
          %s275 = scalar_lea.vmem [#allocation6], %s274
          %s276 = sadd.s32 %s24, 1
          %s277 = smul.u32 %s276, 2
          %s279 = ssub.s32 64, 64
          %280 = vsyncadd %s272, %s279
          %s281 = smul.addr %s277, 64
          %s282 = scalar_lea.hbm %s1, %s281
          %s284 = sshll.u32 %s275, 4
          %s285 = int_to_ptr.vmem [resolvable:$true] %s284
          %287 = dma.hbm_to_vmem [thread:$0]  %s282, 64, %s285, %s272
        $region32: #{tpu_custom_call.1} parent=23 // pred_fallthru
          _
        // Predicated region
        $region33: #{tpu_custom_call.1} parent=23 // pred_check
          %p288 = pneg %p106
        $region34: #{tpu_custom_call.1} parent=23 // pred_check_branch
          %290 = sbr.rel (%p288) target = $region36
        $region35: #{tpu_custom_call.1} parent=23 // pred_region
          %s291 = sand.u32 %s24, 1
          %s292 = scalar_lea.sflag [#allocation7], %s291
          %s293 = sand.u32 %s96, 1
          %s294 = smul.addr %s293, 4
          %s295 = scalar_lea.vmem [#allocation8], %s294
          %s296 = sadd.s32 %s24, 1
          %s297 = smul.u32 %s296, 2
          %s298 = sadd.s32 %s297, 1
          %s300 = ssub.s32 64, 64
          %301 = vsyncadd %s292, %s300
          %s302 = smul.addr %s298, 64
          %s303 = scalar_lea.hbm %s2, %s302
          %s305 = sshll.u32 %s295, 4
          %s306 = int_to_ptr.vmem [resolvable:$true] %s305
          %308 = dma.hbm_to_vmem [thread:$0]  %s303, 64, %s306, %s292
        $region36: #{tpu_custom_call.1} parent=23 // pred_fallthru
          _
      $region24: #{tpu_custom_call.1} parent=5 // pred_fallthru
        _
      %p309 = scmp.le.s32.totalorder 1, %s24
      %p310 = scmp.lt.s32.totalorder %s24, 3
      %p311 = pnand %p309, %p310
      %p312 = pneg %p311
      // Predicated region
      $region37: #{tpu_custom_call.1} parent=5 // pred_check
        _
      $region38: #{tpu_custom_call.1} parent=5 // pred_check_branch
        %314 = sbr.rel (%p311) target = $region40
      $region39: #{tpu_custom_call.1} parent=5 // pred_region
        %s315 = ssub.s32 %s24, 1
        %s316 = sand.u32 %s37, 1
        %s317 = scalar_lea.sflag [#allocation3], %s316
        %s318 = sand.u32 %s37, 1
        %s319 = smul.addr %s318, 8
        %s320 = scalar_lea.vmem [#allocation2], %s319
        // Predicated region
        $region41: #{tpu_custom_call.1} parent=39 // pred_check
          %p321 = pneg %p50
        $region42: #{tpu_custom_call.1} parent=39 // pred_check_branch
          %323 = sbr.rel (%p321) target = $region44
        $region43: #{tpu_custom_call.1} parent=39 // pred_region
          %324 = dma.done %s317, 128
        $region44: #{tpu_custom_call.1} parent=39 // pred_fallthru
          _
        %s325 = sand.u32 %s29, 1
        %s326 = scalar_lea.sflag [#allocation7], %s325
        %s327 = sand.u32 %s67, 1
        %s328 = smul.addr %s327, 4
        %s329 = scalar_lea.vmem [#allocation6], %s328
        // Predicated region
        $region45: #{tpu_custom_call.1} parent=39 // pred_check
          %p330 = pneg %p80
        $region46: #{tpu_custom_call.1} parent=39 // pred_check_branch
          %332 = sbr.rel (%p330) target = $region48
        $region47: #{tpu_custom_call.1} parent=39 // pred_region
          %333 = dma.done %s326, 64
        $region48: #{tpu_custom_call.1} parent=39 // pred_fallthru
          _
        %s334 = sand.u32 %s29, 1
        %s335 = scalar_lea.sflag [#allocation7], %s334
        %s336 = sand.u32 %s99, 1
        %s337 = smul.addr %s336, 4
        %s338 = scalar_lea.vmem [#allocation8], %s337
        // Predicated region
        $region49: #{tpu_custom_call.1} parent=39 // pred_check
          %p339 = pneg %p112
        $region50: #{tpu_custom_call.1} parent=39 // pred_check_branch
          %341 = sbr.rel (%p339) target = $region52
        $region51: #{tpu_custom_call.1} parent=39 // pred_region
          %342 = dma.done %s335, 64
        $region52: #{tpu_custom_call.1} parent=39 // pred_fallthru
          _
        // Predicated region
        $region53: #{tpu_custom_call.1} parent=39 // pred_check
          %p343 = pneg %p133
        $region54: #{tpu_custom_call.1} parent=39 // pred_check_branch
          %345 = sbr.rel (%p343) target = $region56
        $region55: #{tpu_custom_call.1} parent=39 // pred_region
          %346 = dma.done [#allocation10], 6144
        $region56: #{tpu_custom_call.1} parent=39 // pred_fallthru
          _
        // Predicated region
        $region57: #{tpu_custom_call.1} parent=39 // pred_check
          %p347 = pneg %p154
        $region58: #{tpu_custom_call.1} parent=39 // pred_check_branch
          %349 = sbr.rel (%p347) target = $region60
        $region59: #{tpu_custom_call.1} parent=39 // pred_region
          %350 = dma.done [#allocation5], 16
        $region60: #{tpu_custom_call.1} parent=39 // pred_fallthru
          _
        %351 = sfence
        %s352 = sand.u32 %s37, 1
        %s353 = scalar_lea.sflag [#allocation3], %s352
        %s354 = sand.u32 %s37, 1
        %s355 = smul.addr %s354, 8
        %s356 = scalar_lea.vmem [#allocation2], %s355
        %p357 = pneg %p50
        %p358 = pneg %p47
        %s359 = sand.u32 %s29, 1
        %s360 = scalar_lea.sflag [#allocation7], %s359
        %s361 = sand.u32 %s67, 1
        %s362 = smul.addr %s361, 4
        %s363 = scalar_lea.vmem [#allocation6], %s362
        %p364 = pneg %p80
        %p365 = pneg %p77
        %s366 = sand.u32 %s29, 1
        %s367 = scalar_lea.sflag [#allocation7], %s366
        %s368 = sand.u32 %s99, 1
        %s369 = smul.addr %s368, 4
        %s370 = scalar_lea.vmem [#allocation8], %s369
        %p371 = pneg %p112
        %p372 = pneg %p109
        %p373 = pneg %p133
        %p374 = pneg %p130
        %p375 = pneg %p154
        %p376 = pneg %p151
        %p377 = pneg %p180
        %p378 = pneg %p177
        %s379 = sand.u32 %s167, 1
        %s380 = scalar_lea.sflag [#allocation4], %s379
        %s381 = sand.u32 %s167, 1
        %s382 = smul.addr %s381, 16
        %s383 = scalar_lea.vmem [#allocation12], %s382
        %p384 = pneg %p206
        %p385 = pneg %p203
        %s386 = sand.u32 %s193, 1
        %s387 = sand.u32 %s193, 1
        %s388 = smul.addr %s387, 64
        %s389 = scalar_lea.vmem [#allocation13], %s388
        %s390 = smul.u32 2, %s29
        %s391 = sadd.s32 %s29, 1
        %s392 = smul.u32 %s391, 2
        %s393 = sadd.s32 %s29, 1
        %s394 = smul.u32 %s393, 2
        %s395 = sadd.s32 %s394, 1
        %s396 = smul.u32 2, %s29
        %s397 = smul.u32 2, %s29
        %v399 = vld [vmem:[%s320] sm:$0xff]
        %v400 = vld [vmem:[%s329] sm:$0xf]
        %v401 = vld [vmem:[%s338] sm:$0xf]
        %v403 = vunpack.c.l.b16 %v399
        %v404 = vunpack.c.h.b16 %v399
        %v405 = vpack.c.b16 %v403, %v403
        %v406 = vpack.c.b16 %v404, %v404
        %v409 = vrot.slane %v406, 4
        %v410 = vrot.slane %v400, 4
        %v411 = vrot.slane %v401, 4
        %vm412 = vcmask 1043456
        %v415 = vsel %vm412, %v405, %v409
        %v419 = vsel %vm412, %v406, %v410
        %v423 = vsel %vm412, %v400, %v411
        %v425 = vld [vmem:[#allocation9] sm:$0xff]
        %v426 = vld [vmem:[#allocation9 + $0x8] sm:$0xff]
        %v427 = vld [vmem:[#allocation9 + $0x10] sm:$0xff]
        %v428 = vld [vmem:[#allocation9 + $0x18] sm:$0xff]
        %v429 = vld [vmem:[#allocation9 + $0x20] sm:$0xff]
        %v430 = vld [vmem:[#allocation9 + $0x28] sm:$0xff]
        %v431 = vld [vmem:[#allocation9 + $0x30] sm:$0xff]
        %v432 = vld [vmem:[#allocation9 + $0x38] sm:$0xff]
        %v433 = vld [vmem:[#allocation9 + $0x40] sm:$0xff]
        %v434 = vld [vmem:[#allocation9 + $0x48] sm:$0xff]
        %v435 = vld [vmem:[#allocation9 + $0x50] sm:$0xff]
        %v436 = vld [vmem:[#allocation9 + $0x58] sm:$0xff]
        %v437 = vld [vmem:[#allocation9 + $0x60] sm:$0xff]
        %v438 = vld [vmem:[#allocation9 + $0x68] sm:$0xff]
        %v439 = vld [vmem:[#allocation9 + $0x70] sm:$0xff]
        %v440 = vld [vmem:[#allocation9 + $0x78] sm:$0xff]
        %v441 = vld [vmem:[#allocation9 + $0x80] sm:$0xff]
        %v442 = vld [vmem:[#allocation9 + $0x88] sm:$0xff]
        %v443 = vld [vmem:[#allocation9 + $0x90] sm:$0xff]
        %v444 = vld [vmem:[#allocation9 + $0x98] sm:$0xff]
        %v445 = vld [vmem:[#allocation9 + $0xa0] sm:$0xff]
        %v446 = vld [vmem:[#allocation9 + $0xa8] sm:$0xff]
        %v447 = vld [vmem:[#allocation9 + $0xb0] sm:$0xff]
        %v448 = vld [vmem:[#allocation9 + $0xb8] sm:$0xff]
        %v449 = vld [vmem:[#allocation9 + $0xc0] sm:$0xff]
        %v450 = vld [vmem:[#allocation9 + $0xc8] sm:$0xff]
        %v451 = vld [vmem:[#allocation9 + $0xd0] sm:$0xff]
        %v452 = vld [vmem:[#allocation9 + $0xd8] sm:$0xff]
        %v453 = vld [vmem:[#allocation9 + $0xe0] sm:$0xff]
        %v454 = vld [vmem:[#allocation9 + $0xe8] sm:$0xff]
        %v455 = vld [vmem:[#allocation9 + $0xf0] sm:$0xff]
        %v456 = vld [vmem:[#allocation9 + $0xf8] sm:$0xff]
        %v457 = vld [vmem:[#allocation9 + $0x100] sm:$0xff]
        %v458 = vld [vmem:[#allocation9 + $0x108] sm:$0xff]
        %v459 = vld [vmem:[#allocation9 + $0x110] sm:$0xff]
        %v460 = vld [vmem:[#allocation9 + $0x118] sm:$0xff]
        %v461 = vld [vmem:[#allocation9 + $0x120] sm:$0xff]
        %v462 = vld [vmem:[#allocation9 + $0x128] sm:$0xff]
        %v463 = vld [vmem:[#allocation9 + $0x130] sm:$0xff]
        %v464 = vld [vmem:[#allocation9 + $0x138] sm:$0xff]
        %v465 = vld [vmem:[#allocation9 + $0x140] sm:$0xff]
        %v466 = vld [vmem:[#allocation9 + $0x148] sm:$0xff]
        %v467 = vld [vmem:[#allocation9 + $0x150] sm:$0xff]
        %v468 = vld [vmem:[#allocation9 + $0x158] sm:$0xff]
        %v469 = vld [vmem:[#allocation9 + $0x160] sm:$0xff]
        %v470 = vld [vmem:[#allocation9 + $0x168] sm:$0xff]
        %v471 = vld [vmem:[#allocation9 + $0x170] sm:$0xff]
        %v472 = vld [vmem:[#allocation9 + $0x178] sm:$0xff]
        %v521 = vunpack.c.l.b16 %v425
        %v522 = vunpack.c.h.b16 %v425
        %v523 = vunpack.c.l.b16 %v426
        %v524 = vunpack.c.h.b16 %v426
        %v525 = vunpack.c.l.b16 %v427
        %v526 = vunpack.c.h.b16 %v427
        %v527 = vunpack.c.l.b16 %v428
        %v528 = vunpack.c.h.b16 %v428
        %v529 = vunpack.c.l.b16 %v429
        %v530 = vunpack.c.h.b16 %v429
        %v531 = vunpack.c.l.b16 %v430
        %v532 = vunpack.c.h.b16 %v430
        %v533 = vunpack.c.l.b16 %v431
        %v534 = vunpack.c.h.b16 %v431
        %v535 = vunpack.c.l.b16 %v432
        %v536 = vunpack.c.h.b16 %v432
        %v537 = vunpack.c.l.b16 %v433
        %v538 = vunpack.c.h.b16 %v433
        %v539 = vunpack.c.l.b16 %v434
        %v540 = vunpack.c.h.b16 %v434
        %v541 = vunpack.c.l.b16 %v435
        %v542 = vunpack.c.h.b16 %v435
        %v543 = vunpack.c.l.b16 %v436
        %v544 = vunpack.c.h.b16 %v436
        %v545 = vunpack.c.l.b16 %v437
        %v546 = vunpack.c.h.b16 %v437
        %v547 = vunpack.c.l.b16 %v438
        %v548 = vunpack.c.h.b16 %v438
        %v549 = vunpack.c.l.b16 %v439
        %v550 = vunpack.c.h.b16 %v439
        %v551 = vunpack.c.l.b16 %v440
        %v552 = vunpack.c.h.b16 %v440
        %v553 = vunpack.c.l.b16 %v441
        %v554 = vunpack.c.h.b16 %v441
        %v555 = vunpack.c.l.b16 %v442
        %v556 = vunpack.c.h.b16 %v442
        %v557 = vunpack.c.l.b16 %v443
        %v558 = vunpack.c.h.b16 %v443
        %v559 = vunpack.c.l.b16 %v444
        %v560 = vunpack.c.h.b16 %v444
        %v561 = vunpack.c.l.b16 %v445
        %v562 = vunpack.c.h.b16 %v445
        %v563 = vunpack.c.l.b16 %v446
        %v564 = vunpack.c.h.b16 %v446
        %v565 = vunpack.c.l.b16 %v447
        %v566 = vunpack.c.h.b16 %v447
        %v567 = vunpack.c.l.b16 %v448
        %v568 = vunpack.c.h.b16 %v448
        %v569 = vunpack.c.l.b16 %v449
        %v570 = vunpack.c.h.b16 %v449
        %v571 = vunpack.c.l.b16 %v450
        %v572 = vunpack.c.h.b16 %v450
        %v573 = vunpack.c.l.b16 %v451
        %v574 = vunpack.c.h.b16 %v451
        %v575 = vunpack.c.l.b16 %v452
        %v576 = vunpack.c.h.b16 %v452
        %v577 = vunpack.c.l.b16 %v453
        %v578 = vunpack.c.h.b16 %v453
        %v579 = vunpack.c.l.b16 %v454
        %v580 = vunpack.c.h.b16 %v454
        %v581 = vunpack.c.l.b16 %v455
        %v582 = vunpack.c.h.b16 %v455
        %v583 = vunpack.c.l.b16 %v456
        %v584 = vunpack.c.h.b16 %v456
        %v585 = vunpack.c.l.b16 %v457
        %v586 = vunpack.c.h.b16 %v457
        %v587 = vunpack.c.l.b16 %v458
        %v588 = vunpack.c.h.b16 %v458
        %v589 = vunpack.c.l.b16 %v459
        %v590 = vunpack.c.h.b16 %v459
        %v591 = vunpack.c.l.b16 %v460
        %v592 = vunpack.c.h.b16 %v460
        %v593 = vunpack.c.l.b16 %v461
        %v594 = vunpack.c.h.b16 %v461
        %v595 = vunpack.c.l.b16 %v462
        %v596 = vunpack.c.h.b16 %v462
        %v597 = vunpack.c.l.b16 %v463
        %v598 = vunpack.c.h.b16 %v463
        %v599 = vunpack.c.l.b16 %v464
        %v600 = vunpack.c.h.b16 %v464
        %v601 = vunpack.c.l.b16 %v465
        %v602 = vunpack.c.h.b16 %v465
        %v603 = vunpack.c.l.b16 %v466
        %v604 = vunpack.c.h.b16 %v466
        %v605 = vunpack.c.l.b16 %v467
        %v606 = vunpack.c.h.b16 %v467
        %v607 = vunpack.c.l.b16 %v468
        %v608 = vunpack.c.h.b16 %v468
        %v609 = vunpack.c.l.b16 %v469
        %v610 = vunpack.c.h.b16 %v469
        %v611 = vunpack.c.l.b16 %v470
        %v612 = vunpack.c.h.b16 %v470
        %v613 = vunpack.c.l.b16 %v471
        %v614 = vunpack.c.h.b16 %v471
        %v615 = vunpack.c.l.b16 %v472
        %v616 = vunpack.c.h.b16 %v472
        %v617 = vpack.c.b16 %v523, %v521
        %v618 = vpack.c.b16 %v524, %v522
        %v619 = vpack.c.b16 %v527, %v525
        %v620 = vpack.c.b16 %v528, %v526
        %v621 = vpack.c.b16 %v531, %v529
        %v622 = vpack.c.b16 %v532, %v530
        %v623 = vpack.c.b16 %v535, %v533
        %v624 = vpack.c.b16 %v536, %v534
        %v625 = vpack.c.b16 %v539, %v537
        %v626 = vpack.c.b16 %v540, %v538
        %v627 = vpack.c.b16 %v543, %v541
        %v628 = vpack.c.b16 %v544, %v542
        %v629 = vpack.c.b16 %v547, %v545
        %v630 = vpack.c.b16 %v548, %v546
        %v631 = vpack.c.b16 %v551, %v549
        %v632 = vpack.c.b16 %v552, %v550
        %v633 = vpack.c.b16 %v555, %v553
        %v634 = vpack.c.b16 %v556, %v554
        %v635 = vpack.c.b16 %v559, %v557
        %v636 = vpack.c.b16 %v560, %v558
        %v637 = vpack.c.b16 %v563, %v561
        %v638 = vpack.c.b16 %v564, %v562
        %v639 = vpack.c.b16 %v567, %v565
        %v640 = vpack.c.b16 %v568, %v566
        %v641 = vpack.c.b16 %v571, %v569
        %v642 = vpack.c.b16 %v572, %v570
        %v643 = vpack.c.b16 %v575, %v573
        %v644 = vpack.c.b16 %v576, %v574
        %v645 = vpack.c.b16 %v579, %v577
        %v646 = vpack.c.b16 %v580, %v578
        %v647 = vpack.c.b16 %v583, %v581
        %v648 = vpack.c.b16 %v584, %v582
        %v649 = vpack.c.b16 %v587, %v585
        %v650 = vpack.c.b16 %v588, %v586
        %v651 = vpack.c.b16 %v591, %v589
        %v652 = vpack.c.b16 %v592, %v590
        %v653 = vpack.c.b16 %v595, %v593
        %v654 = vpack.c.b16 %v596, %v594
        %v655 = vpack.c.b16 %v599, %v597
        %v656 = vpack.c.b16 %v600, %v598
        %v657 = vpack.c.b16 %v603, %v601
        %v658 = vpack.c.b16 %v604, %v602
        %v659 = vpack.c.b16 %v607, %v605
        %v660 = vpack.c.b16 %v608, %v606
        %v661 = vpack.c.b16 %v611, %v609
        %v662 = vpack.c.b16 %v612, %v610
        %v663 = vpack.c.b16 %v615, %v613
        %v664 = vpack.c.b16 %v616, %v614
        %713 = vmatprep.subr.bf16.mxu0 %v632
        %714 = vmatpush1.bf16.msra.mxu0 %v631
        %715 = vmatprep.subr.bf16.mxu0 %v630
        %716 = vmatpush1.bf16.msra.mxu0 %v629
        %717 = vmatprep.subr.bf16.mxu0 %v628
        %718 = vmatpush1.bf16.msra.mxu0 %v627
        %719 = vmatprep.subr.bf16.mxu0 %v626
        %720 = vmatpush1.bf16.msra.mxu0 %v625
        %721 = vmatprep.subr.bf16.mxu0 %v624
        %722 = vmatpush1.bf16.msra.mxu0 %v623
        %723 = vmatprep.subr.bf16.mxu0 %v622
        %724 = vmatpush1.bf16.msra.mxu0 %v621
        %725 = vmatprep.subr.bf16.mxu0 %v620
        %726 = vmatpush1.bf16.msra.mxu0 %v619
        %727 = vmatprep.subr.bf16.mxu0 %v618
        %728 = vmatpush1.bf16.msra.mxu0 %v617
        %729 = vmatprep.subr.bf16.mxu0 %v648
        %730 = vmatpush2.bf16.msra.mxu0 %v647
        %731 = vmatprep.subr.bf16.mxu0 %v646
        %732 = vmatpush2.bf16.msra.mxu0 %v645
        %733 = vmatprep.subr.bf16.mxu0 %v644
        %734 = vmatpush2.bf16.msra.mxu0 %v643
        %735 = vmatprep.subr.bf16.mxu0 %v642
        %736 = vmatpush2.bf16.msra.mxu0 %v641
        %737 = vmatprep.subr.bf16.mxu0 %v640
        %738 = vmatpush2.bf16.msra.mxu0 %v639
        %739 = vmatprep.subr.bf16.mxu0 %v638
        %740 = vmatpush2.bf16.msra.mxu0 %v637
        %741 = vmatprep.subr.bf16.mxu0 %v636
        %742 = vmatpush2.bf16.msra.mxu0 %v635
        %743 = vmatprep.subr.bf16.mxu0 %v634
        %744 = vmatpush2.bf16.msra.mxu0 %v633
        %745 = vmatprep.mubr.bf16.mxu0 %v419
        %746 = vmatmul.mubr.bf16.gmra.mxu0 %v415
        %v747 = vpop.f32.mrf.mxu0
        %v748 = vadd.f32 0.0, %v747
        %v749 = vpop.f32.mrf.mxu0
        %v750 = vadd.f32 0.0, %v749
        %v751 = vpop.f32.mrf.mxu0
        %v752 = vadd.f32 0.0, %v751
        %v753 = vpop.f32.mrf.mxu0
        %v754 = vadd.f32 0.0, %v753
        %755 = vdwg.mxu0
        %756 = vmatprep.subr.bf16.mxu0 %v664
        %757 = vmatpush1.bf16.msra.mxu0 %v663
        %758 = vmatprep.subr.bf16.mxu0 %v662
        %759 = vmatpush1.bf16.msra.mxu0 %v661
        %760 = vmatprep.subr.bf16.mxu0 %v660
        %761 = vmatpush1.bf16.msra.mxu0 %v659
        %762 = vmatprep.subr.bf16.mxu0 %v658
        %763 = vmatpush1.bf16.msra.mxu0 %v657
        %764 = vmatprep.subr.bf16.mxu0 %v656
        %765 = vmatpush1.bf16.msra.mxu0 %v655
        %766 = vmatprep.subr.bf16.mxu0 %v654
        %767 = vmatpush1.bf16.msra.mxu0 %v653
        %768 = vmatprep.subr.bf16.mxu0 %v652
        %769 = vmatpush1.bf16.msra.mxu0 %v651
        %770 = vmatprep.subr.bf16.mxu0 %v650
        %771 = vmatpush1.bf16.msra.mxu0 %v649
        %772 = vmatprep.subr.bf16.mxu0 0
        %773 = vmatpush2.bf16.msra.mxu0 0
        %774 = vmatprep.subr.bf16.mxu0 0
        %775 = vmatpush2.bf16.msra.mxu0 0
        %776 = vmatprep.subr.bf16.mxu0 0
        %777 = vmatpush2.bf16.msra.mxu0 0
        %778 = vmatprep.subr.bf16.mxu0 0
        %779 = vmatpush2.bf16.msra.mxu0 0
        %780 = vmatprep.subr.bf16.mxu0 0
        %781 = vmatpush2.bf16.msra.mxu0 0
        %782 = vmatprep.subr.bf16.mxu0 0
        %783 = vmatpush2.bf16.msra.mxu0 0
        %784 = vmatprep.subr.bf16.mxu0 0
        %785 = vmatpush2.bf16.msra.mxu0 0
        %786 = vmatprep.subr.bf16.mxu0 0
        %787 = vmatpush2.bf16.msra.mxu0 0
        %788 = vmatprep.mubr.bf16.mxu0 0
        %789 = vmatmul.mubr.bf16.gmra.mxu0 %v423
        %v790 = vpop.f32.mrf.mxu0
        %v791 = vadd.f32 %v748, %v790
        %v792 = vpop.f32.mrf.mxu0
        %v793 = vadd.f32 %v750, %v792
        %v794 = vpop.f32.mrf.mxu0
        %v795 = vadd.f32 %v752, %v794
        %v796 = vpop.f32.mrf.mxu0
        %v797 = vadd.f32 %v754, %v796
        %798 = vdwg.mxu0
        %v799 = vadd.f32 %v793, 1e-06
        %v800 = vadd.f32 %v797, 1e-06
        %v801 = vrcp.pop %v799
        %v802 = vrcp.pop %v800
        %v803 = vmul.f32 %v791, %v801
        %v804 = vmul.f32 %v795, %v802
        %s805 = sld [smem:[#allocation11]]
        %v806 = vstv %s805
        %v807 = vmul.f32 %v791, %v806
        %v808 = vmul.f32 %v795, %v806
        %s809 = sld [smem:[#allocation11 + $0x1]]
        %v810 = vstv %s809
        %v811 = vmul.f32 %v793, %v810
        %v812 = vmul.f32 %v797, %v810
        %v813 = vadd.f32 %v807, %v811
        %v814 = vadd.f32 %v808, %v812
        %s815 = sld [smem:[#allocation11 + $0x2]]
        %v816 = vstv %s815
        %v817 = vmul.f32 %v803, %v816
        %v818 = vmul.f32 %v804, %v816
        %v819 = vadd.f32 %v813, %v817
        %v820 = vadd.f32 %v814, %v818
        %s821 = sld [smem:[#allocation11 + $0x3]]
        %v822 = vstv %s821
        %v823 = vadd.f32 %v819, %v822
        %v824 = vadd.f32 %v820, %v822
        %v825 = vsub.f32 0.0, %v823
        %v826 = vsub.f32 0.0, %v824
        %v827 = vmul.f32 %v825, 1.442695
        %v828 = vpow.pop %v827
        %v829 = vmul.f32 %v826, 1.442695
        %v830 = vpow.pop %v829
        %v831 = vadd.f32 %v828, 1.0
        %v832 = vadd.f32 %v830, 1.0
        %v833 = vrcp.pop %v831
        %v834 = vrcp.pop %v832
        %v835 = vmax.f32 %v833, 0.0
        %v836 = vmax.f32 %v834, 0.0
        %v837 = vmin.f32 %v835, 1.0
        %v838 = vmin.f32 %v836, 1.0
        %839 = vst [vmem:[%s383] sm:$0xff] %v837
        %v841 = vcombine.high %v791, %v791
        %v843 = vunpack.c.l.s4 1966171168
        %v844 = vunpack.c.0.s8 %v843
        %v845 = vlaneseq
        %v846 = vshrl.u32 %v845, 7
        %v847 = vsub.s32 %v844, %v846
        %v848 = vrot.slane %v791, %v847
        %v850 = vunpack.c.l.s4 1966171168
        %v851 = vunpack.c.0.s8 %v850
        %v852 = vlaneseq
        %v853 = vshrl.u32 %v852, 7
        %v854 = vsub.s32 %v851, %v853
        %v855 = vrot.slane %v841, %v854
        %v856 = vcombine.high %v848, %v848
        %v857 = vcombine.high %v855, %v855
        %v859 = vunpack.c.l.s4 1966171168
        %v860 = vunpack.c.0.s8 %v859
        %v861 = vlaneseq
        %v862 = vshrl.u32 %v861, 7
        %v863 = vsub.s32 %v860, %v862
        %v864 = vrot.slane %v848, %v863
        %v866 = vunpack.c.l.s4 1966171168
        %v867 = vunpack.c.0.s8 %v866
        %v868 = vlaneseq
        %v869 = vshrl.u32 %v868, 7
        %v870 = vsub.s32 %v867, %v869
        %v871 = vrot.slane %v855, %v870
        %v873 = vunpack.c.l.s4 1966171168
        %v874 = vunpack.c.0.s8 %v873
        %v875 = vlaneseq
        %v876 = vshrl.u32 %v875, 7
        %v877 = vsub.s32 %v874, %v876
        %v878 = vrot.slane %v856, %v877
        %v880 = vunpack.c.l.s4 1966171168
        %v881 = vunpack.c.0.s8 %v880
        %v882 = vlaneseq
        %v883 = vshrl.u32 %v882, 7
        %v884 = vsub.s32 %v881, %v883
        %v885 = vrot.slane %v857, %v884
        %v886 = vcombine.high %v864, %v864
        %v887 = vcombine.high %v871, %v871
        %v888 = vcombine.high %v878, %v878
        %v889 = vcombine.high %v885, %v885
        %898 = vst [vmem:[%s389] sm:$0x1] %v864
        %899 = vst [vmem:[%s389 + $0x8] sm:$0x1] %v878
        %900 = vst [vmem:[%s389 + $0x10] sm:$0x1] %v886
        %901 = vst [vmem:[%s389 + $0x18] sm:$0x1] %v888
        %902 = vst [vmem:[%s389 + $0x20] sm:$0x1] %v871
        %903 = vst [vmem:[%s389 + $0x28] sm:$0x1] %v885
        %904 = vst [vmem:[%s389 + $0x30] sm:$0x1] %v887
        %905 = vst [vmem:[%s389 + $0x38] sm:$0x1] %v889
        %v907 = vcombine.high %v793, %v793
        %v909 = vunpack.c.l.s4 1966171168
        %v910 = vunpack.c.0.s8 %v909
        %v911 = vlaneseq
        %v912 = vshrl.u32 %v911, 7
        %v913 = vsub.s32 %v910, %v912
        %v914 = vrot.slane %v793, %v913
        %v916 = vunpack.c.l.s4 1966171168
        %v917 = vunpack.c.0.s8 %v916
        %v918 = vlaneseq
        %v919 = vshrl.u32 %v918, 7
        %v920 = vsub.s32 %v917, %v919
        %v921 = vrot.slane %v907, %v920
        %v922 = vcombine.high %v914, %v914
        %v923 = vcombine.high %v921, %v921
        %v925 = vunpack.c.l.s4 1966171168
        %v926 = vunpack.c.0.s8 %v925
        %v927 = vlaneseq
        %v928 = vshrl.u32 %v927, 7
        %v929 = vsub.s32 %v926, %v928
        %v930 = vrot.slane %v914, %v929
        %v932 = vunpack.c.l.s4 1966171168
        %v933 = vunpack.c.0.s8 %v932
        %v934 = vlaneseq
        %v935 = vshrl.u32 %v934, 7
        %v936 = vsub.s32 %v933, %v935
        %v937 = vrot.slane %v921, %v936
        %v939 = vunpack.c.l.s4 1966171168
        %v940 = vunpack.c.0.s8 %v939
        %v941 = vlaneseq
        %v942 = vshrl.u32 %v941, 7
        %v943 = vsub.s32 %v940, %v942
        %v944 = vrot.slane %v922, %v943
        %v946 = vunpack.c.l.s4 1966171168
        %v947 = vunpack.c.0.s8 %v946
        %v948 = vlaneseq
        %v949 = vshrl.u32 %v948, 7
        %v950 = vsub.s32 %v947, %v949
        %v951 = vrot.slane %v923, %v950
        %v952 = vcombine.high %v930, %v930
        %v953 = vcombine.high %v937, %v937
        %v954 = vcombine.high %v944, %v944
        %v955 = vcombine.high %v951, %v951
        %964 = vst [vmem:[%s389 + $0x1] sm:$0x1] %v930
        %965 = vst [vmem:[%s389 + $0x9] sm:$0x1] %v944
        %966 = vst [vmem:[%s389 + $0x11] sm:$0x1] %v952
        %967 = vst [vmem:[%s389 + $0x19] sm:$0x1] %v954
        %968 = vst [vmem:[%s389 + $0x21] sm:$0x1] %v937
        %969 = vst [vmem:[%s389 + $0x29] sm:$0x1] %v951
        %970 = vst [vmem:[%s389 + $0x31] sm:$0x1] %v953
        %971 = vst [vmem:[%s389 + $0x39] sm:$0x1] %v955
        %v973 = vcombine.high %v803, %v803
        %v975 = vunpack.c.l.s4 1966171168
        %v976 = vunpack.c.0.s8 %v975
        %v977 = vlaneseq
        %v978 = vshrl.u32 %v977, 7
        %v979 = vsub.s32 %v976, %v978
        %v980 = vrot.slane %v803, %v979
        %v982 = vunpack.c.l.s4 1966171168
        %v983 = vunpack.c.0.s8 %v982
        %v984 = vlaneseq
        %v985 = vshrl.u32 %v984, 7
        %v986 = vsub.s32 %v983, %v985
        %v987 = vrot.slane %v973, %v986
        %v988 = vcombine.high %v980, %v980
        %v989 = vcombine.high %v987, %v987
        %v991 = vunpack.c.l.s4 1966171168
        %v992 = vunpack.c.0.s8 %v991
        %v993 = vlaneseq
        %v994 = vshrl.u32 %v993, 7
        %v995 = vsub.s32 %v992, %v994
        %v996 = vrot.slane %v980, %v995
        %v998 = vunpack.c.l.s4 1966171168
        %v999 = vunpack.c.0.s8 %v998
        %v1000 = vlaneseq
        %v1001 = vshrl.u32 %v1000, 7
        %v1002 = vsub.s32 %v999, %v1001
        %v1003 = vrot.slane %v987, %v1002
        %v1005 = vunpack.c.l.s4 1966171168
        %v1006 = vunpack.c.0.s8 %v1005
        %v1007 = vlaneseq
        %v1008 = vshrl.u32 %v1007, 7
        %v1009 = vsub.s32 %v1006, %v1008
        %v1010 = vrot.slane %v988, %v1009
        %v1012 = vunpack.c.l.s4 1966171168
        %v1013 = vunpack.c.0.s8 %v1012
        %v1014 = vlaneseq
        %v1015 = vshrl.u32 %v1014, 7
        %v1016 = vsub.s32 %v1013, %v1015
        %v1017 = vrot.slane %v989, %v1016
        %v1018 = vcombine.high %v996, %v996
        %v1019 = vcombine.high %v1003, %v1003
        %v1020 = vcombine.high %v1010, %v1010
        %v1021 = vcombine.high %v1017, %v1017
        %1030 = vst [vmem:[%s389 + $0x2] sm:$0x1] %v996
        %1031 = vst [vmem:[%s389 + $0xa] sm:$0x1] %v1010
        %1032 = vst [vmem:[%s389 + $0x12] sm:$0x1] %v1018
        %1033 = vst [vmem:[%s389 + $0x1a] sm:$0x1] %v1020
        %1034 = vst [vmem:[%s389 + $0x22] sm:$0x1] %v1003
        %1035 = vst [vmem:[%s389 + $0x2a] sm:$0x1] %v1017
        %1036 = vst [vmem:[%s389 + $0x32] sm:$0x1] %v1019
        %1037 = vst [vmem:[%s389 + $0x3a] sm:$0x1] %v1021
        %1038 = vst [vmem:[%s383 + $0x8] sm:$0xff] %v838
        %v1040 = vcombine.high %v795, %v795
        %v1042 = vunpack.c.l.s4 1966171168
        %v1043 = vunpack.c.0.s8 %v1042
        %v1044 = vlaneseq
        %v1045 = vshrl.u32 %v1044, 7
        %v1046 = vsub.s32 %v1043, %v1045
        %v1047 = vrot.slane %v795, %v1046
        %v1049 = vunpack.c.l.s4 1966171168
        %v1050 = vunpack.c.0.s8 %v1049
        %v1051 = vlaneseq
        %v1052 = vshrl.u32 %v1051, 7
        %v1053 = vsub.s32 %v1050, %v1052
        %v1054 = vrot.slane %v1040, %v1053
        %v1055 = vcombine.high %v1047, %v1047
        %v1056 = vcombine.high %v1054, %v1054
        %v1058 = vunpack.c.l.s4 1966171168
        %v1059 = vunpack.c.0.s8 %v1058
        %v1060 = vlaneseq
        %v1061 = vshrl.u32 %v1060, 7
        %v1062 = vsub.s32 %v1059, %v1061
        %v1063 = vrot.slane %v1047, %v1062
        %v1065 = vunpack.c.l.s4 1966171168
        %v1066 = vunpack.c.0.s8 %v1065
        %v1067 = vlaneseq
        %v1068 = vshrl.u32 %v1067, 7
        %v1069 = vsub.s32 %v1066, %v1068
        %v1070 = vrot.slane %v1054, %v1069
        %v1072 = vunpack.c.l.s4 1966171168
        %v1073 = vunpack.c.0.s8 %v1072
        %v1074 = vlaneseq
        %v1075 = vshrl.u32 %v1074, 7
        %v1076 = vsub.s32 %v1073, %v1075
        %v1077 = vrot.slane %v1055, %v1076
        %v1079 = vunpack.c.l.s4 1966171168
        %v1080 = vunpack.c.0.s8 %v1079
        %v1081 = vlaneseq
        %v1082 = vshrl.u32 %v1081, 7
        %v1083 = vsub.s32 %v1080, %v1082
        %v1084 = vrot.slane %v1056, %v1083
        %v1085 = vcombine.high %v1063, %v1063
        %v1086 = vcombine.high %v1070, %v1070
        %v1087 = vcombine.high %v1077, %v1077
        %v1088 = vcombine.high %v1084, %v1084
        %1097 = vst [vmem:[%s389 + $0x4] sm:$0x1] %v1063
        %1098 = vst [vmem:[%s389 + $0xc] sm:$0x1] %v1077
        %1099 = vst [vmem:[%s389 + $0x14] sm:$0x1] %v1085
        %1100 = vst [vmem:[%s389 + $0x1c] sm:$0x1] %v1087
        %1101 = vst [vmem:[%s389 + $0x24] sm:$0x1] %v1070
        %1102 = vst [vmem:[%s389 + $0x2c] sm:$0x1] %v1084
        %1103 = vst [vmem:[%s389 + $0x34] sm:$0x1] %v1086
        %1104 = vst [vmem:[%s389 + $0x3c] sm:$0x1] %v1088
        %v1106 = vcombine.high %v797, %v797
        %v1108 = vunpack.c.l.s4 1966171168
        %v1109 = vunpack.c.0.s8 %v1108
        %v1110 = vlaneseq
        %v1111 = vshrl.u32 %v1110, 7
        %v1112 = vsub.s32 %v1109, %v1111
        %v1113 = vrot.slane %v797, %v1112
        %v1115 = vunpack.c.l.s4 1966171168
        %v1116 = vunpack.c.0.s8 %v1115
        %v1117 = vlaneseq
        %v1118 = vshrl.u32 %v1117, 7
        %v1119 = vsub.s32 %v1116, %v1118
        %v1120 = vrot.slane %v1106, %v1119
        %v1121 = vcombine.high %v1113, %v1113
        %v1122 = vcombine.high %v1120, %v1120
        %v1124 = vunpack.c.l.s4 1966171168
        %v1125 = vunpack.c.0.s8 %v1124
        %v1126 = vlaneseq
        %v1127 = vshrl.u32 %v1126, 7
        %v1128 = vsub.s32 %v1125, %v1127
        %v1129 = vrot.slane %v1113, %v1128
        %v1131 = vunpack.c.l.s4 1966171168
        %v1132 = vunpack.c.0.s8 %v1131
        %v1133 = vlaneseq
        %v1134 = vshrl.u32 %v1133, 7
        %v1135 = vsub.s32 %v1132, %v1134
        %v1136 = vrot.slane %v1120, %v1135
        %v1138 = vunpack.c.l.s4 1966171168
        %v1139 = vunpack.c.0.s8 %v1138
        %v1140 = vlaneseq
        %v1141 = vshrl.u32 %v1140, 7
        %v1142 = vsub.s32 %v1139, %v1141
        %v1143 = vrot.slane %v1121, %v1142
        %v1145 = vunpack.c.l.s4 1966171168
        %v1146 = vunpack.c.0.s8 %v1145
        %v1147 = vlaneseq
        %v1148 = vshrl.u32 %v1147, 7
        %v1149 = vsub.s32 %v1146, %v1148
        %v1150 = vrot.slane %v1122, %v1149
        %v1151 = vcombine.high %v1129, %v1129
        %v1152 = vcombine.high %v1136, %v1136
        %v1153 = vcombine.high %v1143, %v1143
        %v1154 = vcombine.high %v1150, %v1150
        %1163 = vst [vmem:[%s389 + $0x5] sm:$0x1] %v1129
        %1164 = vst [vmem:[%s389 + $0xd] sm:$0x1] %v1143
        %1165 = vst [vmem:[%s389 + $0x15] sm:$0x1] %v1151
        %1166 = vst [vmem:[%s389 + $0x1d] sm:$0x1] %v1153
        %1167 = vst [vmem:[%s389 + $0x25] sm:$0x1] %v1136
        %1168 = vst [vmem:[%s389 + $0x2d] sm:$0x1] %v1150
        %1169 = vst [vmem:[%s389 + $0x35] sm:$0x1] %v1152
        %1170 = vst [vmem:[%s389 + $0x3d] sm:$0x1] %v1154
        %v1172 = vcombine.high %v804, %v804
        %v1174 = vunpack.c.l.s4 1966171168
        %v1175 = vunpack.c.0.s8 %v1174
        %v1176 = vlaneseq
        %v1177 = vshrl.u32 %v1176, 7
        %v1178 = vsub.s32 %v1175, %v1177
        %v1179 = vrot.slane %v804, %v1178
        %v1181 = vunpack.c.l.s4 1966171168
        %v1182 = vunpack.c.0.s8 %v1181
        %v1183 = vlaneseq
        %v1184 = vshrl.u32 %v1183, 7
        %v1185 = vsub.s32 %v1182, %v1184
        %v1186 = vrot.slane %v1172, %v1185
        %v1187 = vcombine.high %v1179, %v1179
        %v1188 = vcombine.high %v1186, %v1186
        %v1190 = vunpack.c.l.s4 1966171168
        %v1191 = vunpack.c.0.s8 %v1190
        %v1192 = vlaneseq
        %v1193 = vshrl.u32 %v1192, 7
        %v1194 = vsub.s32 %v1191, %v1193
        %v1195 = vrot.slane %v1179, %v1194
        %v1197 = vunpack.c.l.s4 1966171168
        %v1198 = vunpack.c.0.s8 %v1197
        %v1199 = vlaneseq
        %v1200 = vshrl.u32 %v1199, 7
        %v1201 = vsub.s32 %v1198, %v1200
        %v1202 = vrot.slane %v1186, %v1201
        %v1204 = vunpack.c.l.s4 1966171168
        %v1205 = vunpack.c.0.s8 %v1204
        %v1206 = vlaneseq
        %v1207 = vshrl.u32 %v1206, 7
        %v1208 = vsub.s32 %v1205, %v1207
        %v1209 = vrot.slane %v1187, %v1208
        %v1211 = vunpack.c.l.s4 1966171168
        %v1212 = vunpack.c.0.s8 %v1211
        %v1213 = vlaneseq
        %v1214 = vshrl.u32 %v1213, 7
        %v1215 = vsub.s32 %v1212, %v1214
        %v1216 = vrot.slane %v1188, %v1215
        %v1217 = vcombine.high %v1195, %v1195
        %v1218 = vcombine.high %v1202, %v1202
        %v1219 = vcombine.high %v1209, %v1209
        %v1220 = vcombine.high %v1216, %v1216
        %1229 = vst [vmem:[%s389 + $0x6] sm:$0x1] %v1195
        %1230 = vst [vmem:[%s389 + $0xe] sm:$0x1] %v1209
        %1231 = vst [vmem:[%s389 + $0x16] sm:$0x1] %v1217
        %1232 = vst [vmem:[%s389 + $0x1e] sm:$0x1] %v1219
        %1233 = vst [vmem:[%s389 + $0x26] sm:$0x1] %v1202
        %1234 = vst [vmem:[%s389 + $0x2e] sm:$0x1] %v1216
        %1235 = vst [vmem:[%s389 + $0x36] sm:$0x1] %v1218
        %1236 = vst [vmem:[%s389 + $0x3e] sm:$0x1] %v1220
        %s1237 = sand.u32 %s167, 1
        %s1238 = scalar_lea.sflag [#allocation4], %s1237
        %s1239 = sand.u32 %s167, 1
        %s1240 = smul.addr %s1239, 16
        %s1241 = scalar_lea.vmem [#allocation12], %s1240
        %s1242 = sand.u32 %s193, 1
        %s1243 = sand.u32 %s193, 1
        %s1244 = smul.addr %s1243, 64
        %s1245 = scalar_lea.vmem [#allocation13], %s1244
        // Predicated region
        $region61: #{tpu_custom_call.1} parent=39 // pred_check
          %p1246 = pneg %p177
        $region62: #{tpu_custom_call.1} parent=39 // pred_check_branch
          %1248 = sbr.rel (%p1246) target = $region64
        $region63: #{tpu_custom_call.1} parent=39 // pred_region
          %s1249 = smul.u32 2, %s29
          %s1251 = ssub.s32 256, 256
          %1252 = vsyncadd %s1238, %s1251
          %s1253 = smul.addr %s1249, 128
          %s1254 = scalar_lea.hbm %s5, %s1253
          %s1256 = sshll.u32 %s1241, 4
          %s1257 = int_to_ptr.vmem [resolvable:$true] %s1256
          %1259 = dma.vmem_to_hbm [thread:$0]  %s1257, 256, %s1254, %s1238
        $region64: #{tpu_custom_call.1} parent=39 // pred_fallthru
          _
        // Predicated region
        $region65: #{tpu_custom_call.1} parent=39 // pred_check
          %p1260 = pneg %p203
        $region66: #{tpu_custom_call.1} parent=39 // pred_check_branch
          %1262 = sbr.rel (%p1260) target = $region68
        $region67: #{tpu_custom_call.1} parent=39 // pred_region
          %s1263 = smul.u32 2, %s29
          %s1264 = smul.addr %s1263, 4
          %s1265 = scalar_lea.vmem %s6, %s1264
          // Predicated region
          $region69: #{tpu_custom_call.1} parent=67 // pred_check
            _
          $region70: #{tpu_custom_call.1} parent=67 // pred_check_branch
            %1267 = sbr.rel (0) target = $region72
          $region71: #{tpu_custom_call.1} parent=67 // pred_region
            // Predicated region
            $region73: #{tpu_custom_call.1} parent=71 // pred_check
              _
            $region74: #{tpu_custom_call.1} parent=71 // pred_check_branch
              %1269 = sbr.rel (0) target = $region76
            $region75: #{tpu_custom_call.1} parent=71 // pred_region
              // Predicated region
              $region88: #{tpu_custom_call.1} parent=75 // pred_check
                _
              $region89: #{tpu_custom_call.1} parent=75 // pred_check_branch
                %1299 = sbr.rel (0) target = $region91
              $region90: #{tpu_custom_call.1} parent=75 // pred_region
                loop: start=0, step=1, limit=1
                $region92: #{tpu_custom_call.1} parent=90 // loop_pre_header
                  _
                $region93: #{tpu_custom_call.1} parent=90 // loop_header
                  %s1301 = sphi 0, %s1305
                  %p1302 = scmp.ge.s32.totalorder %s1301, 1
                  %s1306 = sphi %s1245, %s1245
                  %s1307 = sphi %s1265, %s1265
                $region94: #{tpu_custom_call.1} parent=90 // loop_header_branch
                  %1304 = sbr.rel (%p1302) target = $region98
                $region95: #{tpu_custom_call.1} parent=90 // loop_body
                  %v1308 = vld [vmem:[%s1306] sm:$0xff]
                  %1309 = vst [vmem:[%s1307] sm:$0xff] %v1308
                  %v1310 = vld [vmem:[%s1306 + $0x8] sm:$0xff]
                  %1311 = vst [vmem:[%s1307 + $0x10] sm:$0xff] %v1310
                  %v1312 = vld [vmem:[%s1306 + $0x10] sm:$0xff]
                  %1313 = vst [vmem:[%s1307 + $0x20] sm:$0xff] %v1312
                  %v1314 = vld [vmem:[%s1306 + $0x18] sm:$0xff]
                  %1315 = vst [vmem:[%s1307 + $0x30] sm:$0xff] %v1314
                  %v1316 = vld [vmem:[%s1306 + $0x20] sm:$0xff]
                  %1317 = vst [vmem:[%s1307 + $0x40] sm:$0xff] %v1316
                  %v1318 = vld [vmem:[%s1306 + $0x28] sm:$0xff]
                  %1319 = vst [vmem:[%s1307 + $0x50] sm:$0xff] %v1318
                  %v1320 = vld [vmem:[%s1306 + $0x30] sm:$0xff]
                  %1321 = vst [vmem:[%s1307 + $0x60] sm:$0xff] %v1320
                  %v1322 = vld [vmem:[%s1306 + $0x38] sm:$0xff]
                  %1323 = vst [vmem:[%s1307 + $0x70] sm:$0xff] %v1322
                $region96: #{tpu_custom_call.1} parent=90 // loop_footer
                  %s1305 = sadd.s32 1, %s1301
                $region97: #{tpu_custom_call.1} parent=90 // loop_footer_branch
                  %1300 = sbr.rel target = $region93
                $region98: #{tpu_custom_call.1} parent=90 // loop_exit
                  _
              $region91: #{tpu_custom_call.1} parent=75 // pred_fallthru
                _
              // Predicated region
              $region99: #{tpu_custom_call.1} parent=75 // pred_check
                _
              $region100: #{tpu_custom_call.1} parent=75 // pred_check_branch
                %1325 = sbr.rel target = $region102
              $region101: #{tpu_custom_call.1} parent=75 // pred_region
                _
              $region102: #{tpu_custom_call.1} parent=75 // pred_fallthru
                _
            $region76: #{tpu_custom_call.1} parent=71 // pred_fallthru
              _
            // Predicated region
            $region77: #{tpu_custom_call.1} parent=71 // pred_check
              _
            $region78: #{tpu_custom_call.1} parent=71 // pred_check_branch
              %1271 = sbr.rel target = $region80
            $region79: #{tpu_custom_call.1} parent=71 // pred_region
              %s1273 = ssub.s32 256, 1
              loop: start=0, step=1, limit=1
              $region81: #{tpu_custom_call.1} parent=79 // loop_pre_header
                _
              $region82: #{tpu_custom_call.1} parent=79 // loop_header
                %s1275 = sphi 0, %s1279
                %p1276 = scmp.ge.s32.totalorder %s1275, 1
                %s1280 = sphi %s1245, %s1245
                %s1281 = sphi %s1265, %s1265
              $region83: #{tpu_custom_call.1} parent=79 // loop_header_branch
                %1278 = sbr.rel (%p1276) target = $region87
              $region84: #{tpu_custom_call.1} parent=79 // loop_body
                %v1282 = vld [vmem:[%s1280] sm:%s1273]
                %1283 = vst [vmem:[%s1281] sm:%s1273] %v1282
                %v1284 = vld [vmem:[%s1280 + $0x8] sm:%s1273]
                %1285 = vst [vmem:[%s1281 + $0x10] sm:%s1273] %v1284
                %v1286 = vld [vmem:[%s1280 + $0x10] sm:%s1273]
                %1287 = vst [vmem:[%s1281 + $0x20] sm:%s1273] %v1286
                %v1288 = vld [vmem:[%s1280 + $0x18] sm:%s1273]
                %1289 = vst [vmem:[%s1281 + $0x30] sm:%s1273] %v1288
                %v1290 = vld [vmem:[%s1280 + $0x20] sm:%s1273]
                %1291 = vst [vmem:[%s1281 + $0x40] sm:%s1273] %v1290
                %v1292 = vld [vmem:[%s1280 + $0x28] sm:%s1273]
                %1293 = vst [vmem:[%s1281 + $0x50] sm:%s1273] %v1292
                %v1294 = vld [vmem:[%s1280 + $0x30] sm:%s1273]
                %1295 = vst [vmem:[%s1281 + $0x60] sm:%s1273] %v1294
                %v1296 = vld [vmem:[%s1280 + $0x38] sm:%s1273]
                %1297 = vst [vmem:[%s1281 + $0x70] sm:%s1273] %v1296
              $region85: #{tpu_custom_call.1} parent=79 // loop_footer
                %s1279 = sadd.s32 1, %s1275
              $region86: #{tpu_custom_call.1} parent=79 // loop_footer_branch
                %1274 = sbr.rel target = $region82
              $region87: #{tpu_custom_call.1} parent=79 // loop_exit
                _
            $region80: #{tpu_custom_call.1} parent=71 // pred_fallthru
              _
          $region72: #{tpu_custom_call.1} parent=67 // pred_fallthru
            _
          %1326 = vnop
        $region68: #{tpu_custom_call.1} parent=39 // pred_fallthru
          _
      $region40: #{tpu_custom_call.1} parent=5 // pred_fallthru
        _
      %p1327 = scmp.le.s32.totalorder 2, %s24
      // Predicated region
      $region103: #{tpu_custom_call.1} parent=5 // pred_check
        %p1328 = pneg %p1327
      $region104: #{tpu_custom_call.1} parent=5 // pred_check_branch
        %1330 = sbr.rel (%p1328) target = $region106
      $region105: #{tpu_custom_call.1} parent=5 // pred_region
        %s1331 = ssub.s32 %s24, 2
        // Predicated region
        $region107: #{tpu_custom_call.1} parent=105 // pred_check
          %p1332 = pneg %p183
        $region108: #{tpu_custom_call.1} parent=105 // pred_check_branch
          %1334 = sbr.rel (%p1332) target = $region110
        $region109: #{tpu_custom_call.1} parent=105 // pred_region
          %s1335 = sand.u32 %s168, 1
          %s1336 = scalar_lea.sflag [#allocation4], %s1335
          %s1337 = sand.u32 %s168, 1
          %s1338 = smul.addr %s1337, 16
          %s1339 = scalar_lea.vmem [#allocation12], %s1338
          %1340 = dma.done %s1336, 256
        $region110: #{tpu_custom_call.1} parent=105 // pred_fallthru
          _
        // Predicated region
        $region111: #{tpu_custom_call.1} parent=105 // pred_check
          %p1341 = pneg %p209
        $region112: #{tpu_custom_call.1} parent=105 // pred_check_branch
          %1343 = sbr.rel (%p1341) target = $region114
        $region113: #{tpu_custom_call.1} parent=105 // pred_region
          %s1344 = sand.u32 %s194, 1
          %s1345 = sand.u32 %s194, 1
          %s1346 = smul.addr %s1345, 64
          %s1347 = scalar_lea.vmem [#allocation13], %s1346
        $region114: #{tpu_custom_call.1} parent=105 // pred_fallthru
          _
      $region106: #{tpu_custom_call.1} parent=5 // pred_fallthru
        _
    $region6: #{tpu_custom_call.1} parent=1 // loop_footer
      %s28 = sadd.s32 1, %s24
    $region7: #{tpu_custom_call.1} parent=1 // loop_footer_branch
      %23 = sbr.rel target = $region3
    $region8: #{tpu_custom_call.1} parent=1 // loop_exit
      _
    %1348 = vsyncpa [#allocation3], 1
    %s1349 = scalar_lea.sflag [#allocation3], 1
    %1350 = vsyncpa %s1349, 1
    %1351 = vsyncpa [#allocation7], 1
    %s1352 = scalar_lea.sflag [#allocation7], 1
    %1353 = vsyncpa %s1352, 1
    %1354 = vsyncpa [#allocation10], 1
    %1355 = vsyncpa [#allocation4], 1
    %s1356 = scalar_lea.sflag [#allocation4], 1
    %1357 = vsyncpa %s1356, 1
    %1358 = vsyncpa [#allocation5], 1
    %s1359 = scalar_lea.sflag [#allocation5], 1
    %1360 = vsyncpa %s1359, 1

</llo_original>
